<compile_context>
chip_gen: v5e
topology: v5e:2x2
jax: 0.10.0
libtpu: 0.0.40
codegen_flags: <defaults>
</compile_context>

<pallas_src>
import math
import functools

import jax
import jax.numpy as jnp
from jax.experimental import pallas as pl
from jax.experimental.pallas import tpu as pltpu


def _round_up(x, m):
    return ((x + m - 1) // m) * m


def _modulator_kernel(num_layers, dim_hidden, z_ref, wz_ref, wh_ref, b_ref, out_ref):
    """Fused forward over all layers for one batch tile.

    z_ref  : (TB, Din)            latent block
    wz_ref : (Din, Wpad)          all layers' z-columns, transposed, fused,
                                  zero-padded to a multiple of 128 lanes
    wh_ref : (max(L-1,1), H, H)   transposed h-part of layers 1..L-1
    b_ref  : (1, Wpad)            all biases, fused + zero-padded
    out_ref: (TB, Wpad)           lane-dense slab of all hidden states
    """
    H = dim_hidden
    z = z_ref[...]

    # One lane-dense MXU push for every layer's z-projection (+ bias).
    zproj = jnp.dot(z, wz_ref[...], preferred_element_type=jnp.float32) + b_ref[...]

    # Layer 0 (and zero pad columns): full-width, unmasked lane-dense store.
    # Columns of layers 1..L-1 are overwritten below with the correct values.
    a0 = jnp.maximum(zproj, 0.0)
    out_ref[...] = a0.astype(out_ref.dtype)
    h = a0[:, :H]                                    # f32 carry for next layer

    # Layers 1..L-1:  h_l = ReLU(h_{l-1} @ Wh_l^T + z @ Wz_l^T + b_l)
    # (== ReLU(cat(h, z) @ W_l^T + b_l); concat eliminated algebraically)
    for l in range(1, num_layers):
        y = jnp.dot(h.astype(wh_ref.dtype), wh_ref[l - 1],
                    preferred_element_type=jnp.float32)
        h = jnp.maximum(y + zproj[:, l * H:(l + 1) * H], 0.0)
        # Write into the slab at its static lane offset as soon as computed.
        out_ref[:, l * H:(l + 1) * H] = h.astype(out_ref.dtype)


def init_modulator_params(key, dim_in, dim_hidden, num_layers, dtype=jnp.float32):
    """nn.Linear-style params: per layer (W: (H, Din_l), b: (H,))."""
    params = []
    for ind in range(num_layers):
        dim = dim_in if ind == 0 else dim_hidden + dim_in
        key, kw, kb = jax.random.split(key, 3)
        bound = 1.0 / math.sqrt(dim)
        w = jax.random.uniform(kw, (dim_hidden, dim), dtype, -bound, bound)
        b = jax.random.uniform(kb, (dim_hidden,), dtype, -bound, bound)
        params.append((w, b))
    return params


def prepare_params(params, dim_in):
    """One-time transpose / split / fuse / pad of the PyTorch-style weights."""
    num_layers = len(params)
    H = params[0][0].shape[0]
    dtype = params[0][0].dtype
    w_valid = num_layers * H
    w_pad = _round_up(w_valid, 128)          # lane-dense slab width

    wz_cols, wh_list, b_list = [], [], []
    for l, (w, bias) in enumerate(params):
        if l == 0:
            wz_cols.append(w.T)              # (Din, H)
        else:
            wh_list.append(w[:, :H].T)       # (H, H)   acts on h
            wz_cols.append(w[:, H:].T)       # (Din, H) acts on z
        b_list.append(bias)

    wz_all = jnp.concatenate(wz_cols, axis=1)        # (Din, L*H)
    b_flat = jnp.concatenate(b_list)[None, :]        # (1, L*H)
    if w_pad != w_valid:                             # zero-pad -> pad cols stay 0
        wz_all = jnp.pad(wz_all, ((0, 0), (0, w_pad - w_valid)))
        b_flat = jnp.pad(b_flat, ((0, 0), (0, w_pad - w_valid)))

    if num_layers > 1:
        wh = jnp.stack(wh_list)                      # (L-1, H, H)
    else:
        wh = jnp.zeros((1, H, H), dtype)             # dummy, never read

    return dict(wz_all=wz_all, wh=wh, b_flat=b_flat,
                num_layers=num_layers, dim_hidden=H, dim_in=dim_in)


def modulator_forward(packed, z, *, batch_tile=4096, return_slab=False):
    """Matches Modulator.forward.

    By default returns the tuple of per-layer hidden states (module semantics).
    For best end-to-end perf, pass return_slab=True and let consumers slice the
    lane-dense slab themselves (avoids L strided-column copies in XLA).
    """
    wz_all, wh, b_flat = packed["wz_all"], packed["wh"], packed["b_flat"]
    num_layers, H = packed["num_layers"], packed["dim_hidden"]
    dim_in, w_pad = wz_all.shape
    B = z.shape[0]

    # Dtype-dependent sublane granularity (8 f32 / 16 bf16 / 32 int8-fp8).
    itemsize = jnp.dtype(z.dtype).itemsize
    sublane = max(8, 32 // itemsize)

    # Cap tile so double-buffered z + out blocks (+ resident weights) fit in
    # the default 32-MiB scoped VMEM on every generation (v7x: 64 MiB phys).
    weight_bytes = (wz_all.size * wz_all.dtype.itemsize
                    + wh.size * wh.dtype.itemsize
                    + b_flat.size * b_flat.dtype.itemsize)
    per_row = 2 * (dim_in + w_pad) * itemsize          # 2x double-buffering
    budget = max((24 << 20) - weight_bytes, per_row * sublane)
    tb_cap = max(sublane, (budget // per_row) // sublane * sublane)
    batch_tile = min(batch_tile, tb_cap)

    # Grid-first tiling: bounds padding waste to < one sublane group per tile.
    g = max(1, pl.cdiv(B, batch_tile))
    # v7x: keep >= 2 grid steps so the "parallel" axis can shard over 2 TCs.
    if g == 1 and B >= 2048:
        g = 2
    tb = _round_up(pl.cdiv(B, g), sublane)
    b_pad = g * tb

    if b_pad != B:
        z = jnp.pad(z, ((0, b_pad - B), (0, 0)))

    out = pl.pallas_call(
        functools.partial(_modulator_kernel, num_layers, H),
        out_shape=jax.ShapeDtypeStruct((b_pad, w_pad), z.dtype),
        grid=(g,),
        in_specs=[
            pl.BlockSpec((tb, dim_in), lambda i: (i, 0)),
            # Constant index_maps -> weights/bias DMA'd once, VMEM-resident.
            pl.BlockSpec((dim_in, w_pad), lambda i: (0, 0)),
            pl.BlockSpec(wh.shape, lambda i: (0, 0, 0)),
            pl.BlockSpec((1, w_pad), lambda i: (0, 0)),
        ],
        # Lane-dense slab output (w_pad is a multiple of 128 -> unmasked vst).
        out_specs=pl.BlockSpec((tb, w_pad), lambda i: (i, 0)),
        compiler_params=pltpu.CompilerParams(
            dimension_semantics=("parallel",),
        ),
    )(z, wz_all, wh, b_flat)

    if return_slab:
        return out[:B, :num_layers * H]
    # NOTE: these per-layer column slices become strided copies in XLA; prefer
    # return_slab=True when the consumer can slice (or fuse) the slab itself.
    return tuple(out[:B, l * H:(l + 1) * H] for l in range(num_layers))


def modulator_reference(params, z):
    """Pure-JAX reference identical to the PyTorch module."""
    x = z
    hiddens = []
    for (w, bias) in params:
        x = jnp.maximum(x @ w.T + bias, 0.0)
        hiddens.append(x)
        x = jnp.concatenate((x, z), axis=1)
    return tuple(hiddens)


if __name__ == "__main__":
    B, dim_in, dim_hidden, num_layers = 2, 4, 32, 3

    key = jax.random.PRNGKey(0)
    kz, kp = jax.random.split(key)
    z = jax.random.normal(kz, (B, dim_in), jnp.float32)

    params = init_modulator_params(kp, dim_in, dim_hidden, num_layers)
    packed = prepare_params(params, dim_in)       # one-time transpose/split/pad

    outs = modulator_forward(packed, z)
    outs = jax.block_until_ready(outs)

    refs = modulator_reference(params, z)
    for o, r in zip(outs, refs):
        assert o.shape == (B, dim_hidden)
        assert jnp.allclose(o, r, atol=1e-5, rtol=1e-5)

    print("KERNEL_OK")
</pallas_src>

<mosaic_0001>
module attributes {stable_mosaic.version = 11 : i64} {
  func.func @_modulator_kernel(%arg0: i32, %arg1: memref<8x4xf32, #tpu.memory_space<vmem>>, %arg2: memref<4x128xf32, #tpu.memory_space<vmem>>, %arg3: memref<2x32x32xf32, #tpu.memory_space<vmem>>, %arg4: memref<1x128xf32, #tpu.memory_space<vmem>>, %arg5: memref<8x128xf32, #tpu.memory_space<vmem>>) attributes {dimension_semantics = [#tpu.dimension_semantics<parallel>], iteration_bounds = array<i64: 1>, scalar_prefetch = 0 : i64, scratch_operands = 0 : i64, tpu.core_type = #tpu.core_type<tc>, window_params = [{transform_indices = @transform_0, window_bounds = array<i64: 8, 4>}, {pipeline_mode = #tpu.pipeline_mode<synchronous>, transform_indices = @transform_1, window_bounds = array<i64: 4, 128>}, {pipeline_mode = #tpu.pipeline_mode<synchronous>, transform_indices = @transform_2, window_bounds = array<i64: 2, 32, 32>}, {pipeline_mode = #tpu.pipeline_mode<synchronous>, transform_indices = @transform_3, window_bounds = array<i64: 1, 128>}, {transform_indices = @transform_4, window_bounds = array<i64: 8, 128>}]} {
    %c0 = arith.constant 0 : index
    %c0_0 = arith.constant 0 : index
    %0 = vector.load %arg1[%c0, %c0_0] : memref<8x4xf32, #tpu.memory_space<vmem>>, vector<8x4xf32>
    %c0_1 = arith.constant 0 : index
    %c0_2 = arith.constant 0 : index
    %1 = vector.load %arg2[%c0_1, %c0_2] : memref<4x128xf32, #tpu.memory_space<vmem>>, vector<4x128xf32>
    %cst = arith.constant dense<0.000000e+00> : vector<8x128xf32>
    %2 = tpu.matmul %0, %1, %cst {dimension_numbers = #tpu.dot_dimension_numbers<[1], [0], [0], [1], [0, 0, 1, 1], [], []>} : vector<8x4xf32>, vector<4x128xf32>, vector<8x128xf32> -> vector<8x128xf32>
    %c0_3 = arith.constant 0 : index
    %c0_4 = arith.constant 0 : index
    %3 = vector.load %arg4[%c0_3, %c0_4] : memref<1x128xf32, #tpu.memory_space<vmem>>, vector<1x128xf32>
    %4 = vector.broadcast %3 : vector<1x128xf32> to vector<8x128xf32>
    %5 = arith.addf %2, %4 : vector<8x128xf32>
    %cst_5 = arith.constant 0.000000e+00 : f32
    %6 = vector.broadcast %cst_5 : f32 to vector<8x128xf32>
    %7 = arith.maximumf %5, %6 : vector<8x128xf32>
    %c0_6 = arith.constant 0 : index
    %c0_7 = arith.constant 0 : index
    %8 = vector.load %arg5[%c0_6, %c0_7] : memref<8x128xf32, #tpu.memory_space<vmem>>, vector<8x128xf32>
    tpu.vector_store %arg5[%c0_6, %c0_7], %7 {strides = array<i32>} : memref<8x128xf32, #tpu.memory_space<vmem>>, vector<8x128xf32>,
    %9 = vector.extract_strided_slice %7 {offsets = [0, 0], sizes = [8, 32], strides = [1, 1]} : vector<8x128xf32> to vector<8x32xf32>
    %c0_8 = arith.constant 0 : index
    %c0_9 = arith.constant 0 : index
    %c0_10 = arith.constant 0 : index
    %10 = vector.load %arg3[%c0_8, %c0_9, %c0_10] : memref<2x32x32xf32, #tpu.memory_space<vmem>>, vector<1x32x32xf32>
    %11 = vector.shape_cast %10 : vector<1x32x32xf32> to vector<32x32xf32>
    %cst_11 = arith.constant dense<0.000000e+00> : vector<8x32xf32>
    %12 = tpu.matmul %9, %11, %cst_11 {dimension_numbers = #tpu.dot_dimension_numbers<[1], [0], [0], [1], [0, 0, 1, 1], [], []>} : vector<8x32xf32>, vector<32x32xf32>, vector<8x32xf32> -> vector<8x32xf32>
    %13 = vector.extract_strided_slice %5 {offsets = [0, 32], sizes = [8, 32], strides = [1, 1]} : vector<8x128xf32> to vector<8x32xf32>
    %14 = arith.addf %12, %13 : vector<8x32xf32>
    %cst_12 = arith.constant 0.000000e+00 : f32
    %15 = vector.broadcast %cst_12 : f32 to vector<8x32xf32>
    %16 = arith.maximumf %14, %15 : vector<8x32xf32>
    %c0_13 = arith.constant 0 : index
    %c32 = arith.constant 32 : index
    %17 = vector.load %arg5[%c0_13, %c32] : memref<8x128xf32, #tpu.memory_space<vmem>>, vector<8x32xf32>
    tpu.vector_store %arg5[%c0_13, %c32], %16 {strides = array<i32>} : memref<8x128xf32, #tpu.memory_space<vmem>>, vector<8x32xf32>,
    %c1 = arith.constant 1 : index
    %c0_14 = arith.constant 0 : index
    %c0_15 = arith.constant 0 : index
    %18 = vector.load %arg3[%c1, %c0_14, %c0_15] : memref<2x32x32xf32, #tpu.memory_space<vmem>>, vector<1x32x32xf32>
    %19 = vector.shape_cast %18 : vector<1x32x32xf32> to vector<32x32xf32>
    %cst_16 = arith.constant dense<0.000000e+00> : vector<8x32xf32>
    %20 = tpu.matmul %16, %19, %cst_16 {dimension_numbers = #tpu.dot_dimension_numbers<[1], [0], [0], [1], [0, 0, 1, 1], [], []>} : vector<8x32xf32>, vector<32x32xf32>, vector<8x32xf32> -> vector<8x32xf32>
    %21 = vector.extract_strided_slice %5 {offsets = [0, 64], sizes = [8, 32], strides = [1, 1]} : vector<8x128xf32> to vector<8x32xf32>
    %22 = arith.addf %20, %21 : vector<8x32xf32>
    %cst_17 = arith.constant 0.000000e+00 : f32
    %23 = vector.broadcast %cst_17 : f32 to vector<8x32xf32>
    %24 = arith.maximumf %22, %23 : vector<8x32xf32>
    %c0_18 = arith.constant 0 : index
    %c64 = arith.constant 64 : index
    %25 = vector.load %arg5[%c0_18, %c64] : memref<8x128xf32, #tpu.memory_space<vmem>>, vector<8x32xf32>
    tpu.vector_store %arg5[%c0_18, %c64], %24 {strides = array<i32>} : memref<8x128xf32, #tpu.memory_space<vmem>>, vector<8x32xf32>,
    return
  }
  func.func @transform_0(%arg0: i32) -> (i32, i32) {
    %c0_i32 = arith.constant 0 : i32
    %c0_i32_0 = arith.constant 0 : i32
    return %arg0, %c0_i32 : i32, i32
  }
  func.func @transform_1(%arg0: i32) -> (i32, i32) {
    %c0_i32 = arith.constant 0 : i32
    %c0_i32_0 = arith.constant 0 : i32
    %c0_i32_1 = arith.constant 0 : i32
    return %c0_i32, %c0_i32_0 : i32, i32
  }
  func.func @transform_2(%arg0: i32) -> (i32, i32, i32) {
    %c0_i32 = arith.constant 0 : i32
    %c0_i32_0 = arith.constant 0 : i32
    %c0_i32_1 = arith.constant 0 : i32
    %c0_i32_2 = arith.constant 0 : i32
    return %c0_i32, %c0_i32_0, %c0_i32_1 : i32, i32, i32
  }
  func.func @transform_3(%arg0: i32) -> (i32, i32) {
    %c0_i32 = arith.constant 0 : i32
    %c0_i32_0 = arith.constant 0 : i32
    %c0_i32_1 = arith.constant 0 : i32
    return %c0_i32, %c0_i32_0 : i32, i32
  }
  func.func @transform_4(%arg0: i32) -> (i32, i32) {
    %c0_i32 = arith.constant 0 : i32
    %c0_i32_0 = arith.constant 0 : i32
    return %arg0, %c0_i32 : i32, i32
  }
}

</mosaic_0001>

<llo_original>
// kernel: tpu_custom_call.1
$region0: #{tpu_custom_call.1}
  #allocation0 [shape = 'u32[]', space=smem, size = 0x4, offset = 0x4, fixed_abs, tag = 'smem constant byte address 0x4 - core index']
  #allocation1 [shape = 'u32[72,128]{1,0:T(1,128)}', space=vmem, size = 0x9000, scoped, tag = 'internal scratch']
  %s0 = inlined_call_operand.vmem [shape: f32[8,4], index: 0, kind: input, shape index: {}]
  %s1 = inlined_call_operand.vmem [shape: f32[4,128], index: 1, kind: input, shape index: {}]
  %s2 = inlined_call_operand.hbm [shape: f32[2,32,32], index: 2, kind: input, shape index: {}]
  %s3 = inlined_call_operand.vmem [shape: f32[1,128], index: 3, kind: input, shape index: {}]
  %s4 = inlined_call_operand.hbm [shape: f32[8,128], index: 4, kind: output, shape index: {}]
  %s5 = sld [smem:[#allocation0]]
  $region30: #{tpu_custom_call.1} parent=0
    _
  %s7 = ssub.s32 1, %s5
  %s8 = scalar_select 0, %s7, %s5
  $region1: #{tpu_custom_call.1} parent=0
    #allocation2 [shape = 'u8[32768]{0}', space=vmem, size = 0x8000, scoped, tag = 'input window, operand 2, single buffered']
    #allocation3 [shape = 's32[1]{0}', space=sflag, size = 0x4, scoped, tag = 'scoped memory for tpu_custom_call.1']
    #allocation4 [shape = 's32[1]{0}', space=sflag, size = 0x4, scoped, tag = 'scoped memory for tpu_custom_call.1']
    #allocation5 [shape = 'u8[4096]{0}', space=vmem, size = 0x1000, scoped, tag = 'output window, operand 0, single buffered']
    %9 = vsyncpa [#allocation3], 0
    %10 = vsyncpa [#allocation4], 0
    // Predicated region
    $region2: #{tpu_custom_call.1} parent=1 // pred_check
      _
    $region3: #{tpu_custom_call.1} parent=1 // pred_check_branch
      %12 = sbr.rel (0) target = $region5
    $region4: #{tpu_custom_call.1} parent=1 // pred_region
      _
    $region5: #{tpu_custom_call.1} parent=1 // pred_fallthru
      _
    // Predicated region
    $region6: #{tpu_custom_call.1} parent=1 // pred_check
      _
    $region7: #{tpu_custom_call.1} parent=1 // pred_check_branch
      %14 = sbr.rel (0) target = $region9
    $region8: #{tpu_custom_call.1} parent=1 // pred_region
      _
    $region9: #{tpu_custom_call.1} parent=1 // pred_fallthru
      _
    // Predicated region
    $region10: #{tpu_custom_call.1} parent=1 // pred_check
      _
    $region11: #{tpu_custom_call.1} parent=1 // pred_check_branch
      %16 = sbr.rel (0) target = $region13
    $region12: #{tpu_custom_call.1} parent=1 // pred_region
      %18 = vsyncadd [#allocation3], 0
      %s19 = sshll.u32 %s2, 4
      %s20 = int_to_ptr.hbm [resolvable:$true] %s19
      %s21 = sshll.u32 [#allocation2], 4
      %s22 = int_to_ptr.vmem [resolvable:$true] %s21
      %27 = dma.hbm_to_vmem [thread:$0]  %s20, 1024, %s22, [#allocation3], 128, 128, 8
    $region13: #{tpu_custom_call.1} parent=1 // pred_fallthru
      _
    // Predicated region
    $region14: #{tpu_custom_call.1} parent=1 // pred_check
      _
    $region15: #{tpu_custom_call.1} parent=1 // pred_check_branch
      %29 = sbr.rel (0) target = $region17
    $region16: #{tpu_custom_call.1} parent=1 // pred_region
      _
    $region17: #{tpu_custom_call.1} parent=1 // pred_fallthru
      _
    // Predicated region
    $region18: #{tpu_custom_call.1} parent=1 // pred_check
      _
    $region19: #{tpu_custom_call.1} parent=1 // pred_check_branch
      %31 = sbr.rel (0) target = $region21
    $region20: #{tpu_custom_call.1} parent=1 // pred_region
      %33 = dma.done [#allocation3], 1024
    $region21: #{tpu_custom_call.1} parent=1 // pred_fallthru
      _
    %v34 = vld [vmem:[%s0] sm:$0xff]
    %v35 = vld [vmem:[%s1] sm:$0xf]
    %v36 = vld [vmem:[%s3] sm:$0x1]
    %v38 = vperm.slane %v36, 0
    %vm40 = vcmask 31744
    %v42 = vsel %vm40, %v34, 0
    %vm44 = vcmask 1043456
    %v46 = vsel %vm44, %v35, 0
    %48 = vmatpush.msra.mxu0 0.0
    %49 = vmatpush.msra.mxu0 0.0
    %50 = vmatpush.msra.mxu0 0.0
    %51 = vmatpush.msra.mxu0 0.0
    %52 = vmatpush.msra.mxu0 0.0
    %53 = vmatpush.msra.mxu0 0.0
    %54 = vmatpush.msra.mxu0 0.0
    %55 = vmatpush.msra.mxu0 0.0
    %56 = vmatpush.msra.mxu0 0.0
    %57 = vmatpush.msra.mxu0 0.0
    %58 = vmatpush.msra.mxu0 0.0
    %59 = vmatpush.msra.mxu0 0.0
    %60 = vmatpush.msra.mxu0 0.0
    %61 = vmatpush.msra.mxu0 0.0
    %62 = vmatpush.msra.mxu0 0.0
    %63 = vmatpush.msra.mxu0 %v46
    %64 = vmatmul.f32.gmra.mxu0 %v42
    %v65 = vpop.f32.mrf.mxu0
    %v66 = vadd.f32 %v38, %v65
    %67 = vdwg.mxu0
    %v68 = vmax.f32 %v66, 0.0
    %69 = vst [vmem:[#allocation5] sm:$0xff] %v68
    %v70 = vld [vmem:[#allocation2] sm:$0xff]
    %v71 = vld [vmem:[#allocation2 + $0x8] sm:$0xff]
    %v72 = vld [vmem:[#allocation2 + $0x10] sm:$0xff]
    %v73 = vld [vmem:[#allocation2 + $0x18] sm:$0xff]
    %75 = vrot.lane.b32.xlu0 %v66, 96
    %v76 = vpop.permute.xlu0 %75
    %vm78 = vcmask 261120
    %v80 = vsel %vm78, %v68, 0
    %82 = vmatpush.msra.mxu0 0.0
    %83 = vmatpush.msra.mxu0 0.0
    %84 = vmatpush.msra.mxu0 0.0
    %85 = vmatpush.msra.mxu0 0.0
    %86 = vmatpush.msra.mxu0 0.0
    %87 = vmatpush.msra.mxu0 0.0
    %88 = vmatpush.msra.mxu0 0.0
    %89 = vmatpush.msra.mxu0 0.0
    %90 = vmatpush.msra.mxu0 0.0
    %91 = vmatpush.msra.mxu0 0.0
    %92 = vmatpush.msra.mxu0 0.0
    %93 = vmatpush.msra.mxu0 0.0
    %94 = vmatpush.msra.mxu0 %v73
    %95 = vmatpush.msra.mxu0 %v72
    %96 = vmatpush.msra.mxu0 %v71
    %97 = vmatpush.msra.mxu0 %v70
    %98 = vmatmul.f32.gmra.mxu0 %v80
    %v99 = vpop.f32.mrf.mxu0
    %v100 = vadd.f32 %v76, %v99
    %101 = vdwg.mxu0
    %v102 = vmax.f32 %v100, 0.0
    %104 = vrot.lane.b32.xlu0 %v102, 32
    %v105 = vpop.permute.xlu0 %104
    %vm107 = vcmask 523520
    %108 = vst.msk [vmem:[#allocation5] sm:$0xff] %vm107, %v105
    %s109 = scalar_lea.vmem [#allocation2], 32
    %v110 = vld [vmem:[%s109] sm:$0xff]
    %v111 = vld [vmem:[%s109 + $0x8] sm:$0xff]
    %v112 = vld [vmem:[%s109 + $0x10] sm:$0xff]
    %v113 = vld [vmem:[%s109 + $0x18] sm:$0xff]
    %114 = vrot.lane.b32.xlu0 %v66, 64
    %v115 = vpop.permute.xlu0 %114
    %v117 = vsel %vm78, %v102, 0
    %119 = vmatpush.msra.mxu0 0.0
    %120 = vmatpush.msra.mxu0 0.0
    %121 = vmatpush.msra.mxu0 0.0
    %122 = vmatpush.msra.mxu0 0.0
    %123 = vmatpush.msra.mxu0 0.0
    %124 = vmatpush.msra.mxu0 0.0
    %125 = vmatpush.msra.mxu0 0.0
    %126 = vmatpush.msra.mxu0 0.0
    %127 = vmatpush.msra.mxu0 0.0
    %128 = vmatpush.msra.mxu0 0.0
    %129 = vmatpush.msra.mxu0 0.0
    %130 = vmatpush.msra.mxu0 0.0
    %131 = vmatpush.msra.mxu0 %v113
    %132 = vmatpush.msra.mxu0 %v112
    %133 = vmatpush.msra.mxu0 %v111
    %134 = vmatpush.msra.mxu0 %v110
    %135 = vmatmul.f32.gmra.mxu0 %v117
    %v136 = vpop.f32.mrf.mxu0
    %v137 = vadd.f32 %v115, %v136
    %138 = vdwg.mxu0
    %v139 = vmax.f32 %v137, 0.0
    %141 = vrot.lane.b32.xlu0 %v139, 64
    %v142 = vpop.permute.xlu0 %141
    %vm144 = vcmask 785920
    %145 = vst.msk [vmem:[#allocation5] sm:$0xff] %vm144, %v142
    // Predicated region
    $region22: #{tpu_custom_call.1} parent=1 // pred_check
      _
    $region23: #{tpu_custom_call.1} parent=1 // pred_check_branch
      %147 = sbr.rel (0) target = $region25
    $region24: #{tpu_custom_call.1} parent=1 // pred_region
      %149 = vsyncadd [#allocation4], 0
      %s151 = sshll.u32 [#allocation5], 4
      %s152 = int_to_ptr.vmem [resolvable:$true] %s151
      %s153 = sshll.u32 %s4, 4
      %s154 = int_to_ptr.hbm [resolvable:$true] %s153
      %156 = dma.vmem_to_hbm [thread:$0]  %s152, 128, %s154, [#allocation4]
    $region25: #{tpu_custom_call.1} parent=1 // pred_fallthru
      _
    // Predicated region
    $region26: #{tpu_custom_call.1} parent=1 // pred_check
      _
    $region27: #{tpu_custom_call.1} parent=1 // pred_check_branch
      %158 = sbr.rel (0) target = $region29
    $region28: #{tpu_custom_call.1} parent=1 // pred_region
      %160 = dma.done [#allocation4], 128
    $region29: #{tpu_custom_call.1} parent=1 // pred_fallthru
      _
    %161 = vsyncpa [#allocation3], 1
    %162 = vsyncpa [#allocation4], 1

</llo_original>
